<compile_context>
chip_gen: v7x
topology: tpu7x:2x2x1
jax: 0.10.0
libtpu: 0.0.40
codegen_flags: <defaults>
</compile_context>

<pallas_src>
import functools

import jax
import jax.numpy as jnp
from jax.experimental import pallas as pl
from jax.experimental.pallas import tpu as pltpu


def _round_up(a: int, b: int) -> int:
    return ((a + b - 1) // b) * b


def _cdiv(a: int, b: int) -> int:
    return (a + b - 1) // b


def _fit_tile(dim: int, target: int, align: int) -> int:
    """Largest tile <= ~target that near-divides `dim`, aligned to `align`."""
    if dim <= target:
        return _round_up(dim, align)
    nblocks = _cdiv(dim, target)
    return _round_up(_cdiv(dim, nblocks), align)


def _tile_targets():
    """(TM, TN, TK, vmem_limit_bytes) per TPU generation, assuming bf16 inputs."""
    try:
        kind = jax.devices()[0].device_kind.lower()
    except Exception:  # pragma: no cover - defensive
        kind = ""
    if "v6" in kind or "trillium" in kind:
        # 128 MiB VMEM, ~1.4 TB/s HBM: large tiles + raised scoped-VMEM limit.
        return 1024, 2048, 512, 96 << 20
    if "7" in kind:
        # v7x: 64 MiB VMEM per TC (32 MiB scoped default), ~3.2 TB/s HBM.
        return 512, 1024, 512, 40 << 20
    if "v5 lite" in kind or "v5e" in kind or "v5lite" in kind:
        # v5e: 16 MiB scoped default is plenty for 512^3 bf16 tiles.
        return 512, 512, 512, 32 << 20
    # v4 / v5p / unknown: conservative mid-size tiles.
    return 512, 1024, 512, 64 << 20


# ----------------------------------------------------------------------------
# Kernels: canonical accumulator matmul over a (M/tm, N/tn, K/tk) grid.
# x tile (tm, tk) bf16, w tile (tk, tn) bf16 (weight pre-transposed once),
# f32 VMEM accumulator, bias added only at the last K step.
# ----------------------------------------------------------------------------
def _linear_kernel_bias(x_ref, w_ref, b_ref, o_ref, acc_ref):
    @pl.when(pl.program_id(2) == 0)
    def _init():
        acc_ref[...] = jnp.zeros_like(acc_ref)

    acc_ref[...] += jnp.dot(x_ref[...], w_ref[...],
                            preferred_element_type=jnp.float32)

    @pl.when(pl.program_id(2) == pl.num_programs(2) - 1)
    def _finalize():
        out = acc_ref[...] + b_ref[...].astype(jnp.float32)
        o_ref[...] = out.astype(o_ref.dtype)


def _linear_kernel_nobias(x_ref, w_ref, o_ref, acc_ref):
    @pl.when(pl.program_id(2) == 0)
    def _init():
        acc_ref[...] = jnp.zeros_like(acc_ref)

    acc_ref[...] += jnp.dot(x_ref[...], w_ref[...],
                            preferred_element_type=jnp.float32)

    @pl.when(pl.program_id(2) == pl.num_programs(2) - 1)
    def _finalize():
        o_ref[...] = acc_ref[...].astype(o_ref.dtype)


@functools.partial(
    jax.jit,
    static_argnames=("tm", "tn", "tk", "out_dtype", "vmem_limit", "has_bias"))
def _linear_pallas(x_p, w_kn, b2d, *, tm, tn, tk, out_dtype, vmem_limit,
                   has_bias):
    M_pad, K_pad = x_p.shape
    N_pad = w_kn.shape[1]
    grid = (M_pad // tm, N_pad // tn, K_pad // tk)
    out_dt = jnp.dtype(out_dtype)

    # Advisory cost: bf16 itemsize + panel re-reads (x read N/tn times, W read
    # M/tm times), output written once.
    bytes_accessed = (grid[1] * M_pad * K_pad * x_p.dtype.itemsize
                      + grid[0] * K_pad * N_pad * w_kn.dtype.itemsize
                      + M_pad * N_pad * out_dt.itemsize)
    if has_bias:
        bytes_accessed += grid[0] * N_pad * b2d.dtype.itemsize
    cost = pl.CostEstimate(flops=2 * M_pad * N_pad * K_pad,
                           transcendentals=0,
                           bytes_accessed=bytes_accessed)

    in_specs = [
        pl.BlockSpec((tm, tk), lambda i, j, k: (i, k)),   # x tile
        pl.BlockSpec((tk, tn), lambda i, j, k: (k, j)),   # weight tile (K, N)
    ]
    if has_bias:
        in_specs.append(pl.BlockSpec((1, tn), lambda i, j, k: (0, j)))
        kernel = _linear_kernel_bias
        args = (x_p, w_kn, b2d)
    else:
        kernel = _linear_kernel_nobias
        args = (x_p, w_kn)

    return pl.pallas_call(
        kernel,
        out_shape=jax.ShapeDtypeStruct((M_pad, N_pad), out_dt),
        grid_spec=pltpu.PrefetchScalarGridSpec(
            num_scalar_prefetch=0,
            grid=grid,
            in_specs=in_specs,
            out_specs=pl.BlockSpec((tm, tn), lambda i, j, k: (i, j)),
            scratch_shapes=[pltpu.VMEM((tm, tn), jnp.float32)],
        ),
        compiler_params=pltpu.CompilerParams(
            dimension_semantics=("parallel", "parallel", "arbitrary"),
            vmem_limit_bytes=int(vmem_limit),
        ),
        cost_estimate=cost,
    )(*args)


class PallasLinear:
    """Forward of LinearWrapper (= F.linear) with hoisted static weight prep.

    The weight is cast to bf16, zero-padded to tile multiples and transposed
    to (K_pad, N_pad) exactly once at construction; per-call work is only the
    activation cast/pad and the pallas_call.
    """

    def __init__(self, weight, bias=None):
        weight = jnp.asarray(weight)
        self.out_features = int(weight.shape[0])
        self.in_features = int(weight.shape[1])

        self.TM, TN, TK, self.vmem_limit = _tile_targets()
        self.tn = _fit_tile(self.out_features, TN, 128)
        self.tk = _fit_tile(self.in_features, TK, 128)
        self.N_pad = _round_up(self.out_features, self.tn)
        self.K_pad = _round_up(self.in_features, self.tk)

        w = jnp.pad(weight.astype(jnp.bfloat16),
                    ((0, self.N_pad - self.out_features),
                     (0, self.K_pad - self.in_features)))
        self.w_kn = jnp.transpose(w)               # (K_pad, N_pad), one-time

        self.has_bias = bias is not None
        if self.has_bias:
            b = jnp.asarray(bias).astype(jnp.float32)
            self.b2d = jnp.pad(b, (0, self.N_pad - self.out_features)
                               ).reshape(1, self.N_pad)
        else:
            self.b2d = None

    def __call__(self, x):
        x = jnp.asarray(x)
        lead = x.shape[:-1]
        x2d = x.reshape(-1, self.in_features)
        M = x2d.shape[0]

        tm = _fit_tile(M, self.TM, 16)             # 16: bf16 sublane packing
        M_pad = _round_up(M, tm)

        # Megacore (v7x): keep >= 2 parallel grid steps by shrinking tm, not tn.
        if (M_pad // tm) * (self.N_pad // self.tn) < 2 and M >= 32:
            tm = max(16, _round_up(_cdiv(M, 2), 16))
            M_pad = _round_up(M, tm)

        x_p = jnp.pad(x2d.astype(jnp.bfloat16),
                      ((0, M_pad - M), (0, self.K_pad - self.in_features)))

        out = _linear_pallas(
            x_p, self.w_kn, self.b2d,
            tm=tm, tn=self.tn, tk=self.tk,
            out_dtype=jnp.dtype(x.dtype).name,
            vmem_limit=self.vmem_limit,
            has_bias=self.has_bias,
        )
        out = out[:M, :self.out_features]
        return out.reshape(*lead, self.out_features)


def linear_wrapper_forward(x, weight, bias=None):
    """One-shot convenience: y = x @ weight.T + bias (native PyTorch layouts).

    For repeated calls with the same weights, construct PallasLinear once so
    the weight pad/cast/transpose is not repeated per forward.
    """
    return PallasLinear(weight, bias)(x)


# TODO(synk): the backward-hook statistics (_ongrad: sum(input**2),
# sum(grad_output**2), grad_output_sq.T @ input_sq, accumulated in
# TwoStageAccumulator) run at gradient time, not in forward; they are not part
# of the forward output and are omitted here.


if __name__ == "__main__":
    key = jax.random.PRNGKey(0)
    k_x, k_w, k_b = jax.random.split(key, 3)

    batch, seq = 2, 8
    in_features, out_features = 32, 48

    x = jax.random.normal(k_x, (batch, seq, in_features), dtype=jnp.float32)
    weight = jax.random.normal(k_w, (out_features, in_features),
                               dtype=jnp.float32) * 0.1
    bias = jax.random.normal(k_b, (out_features,), dtype=jnp.float32) * 0.1

    layer = PallasLinear(weight, bias)     # weight prep hoisted (one-time)
    y = layer(x)
    jax.block_until_ready(y)
    assert y.shape == (batch, seq, out_features)
    assert y.dtype == x.dtype

    # Reference with matched numerics (bf16 inputs, f32 accumulation).
    ref = (jnp.einsum("...k,nk->...n", x.astype(jnp.bfloat16),
                      weight.astype(jnp.bfloat16),
                      preferred_element_type=jnp.float32) + bias)
    assert jnp.allclose(y, ref, atol=1e-2, rtol=1e-2)
    # Loose check against the plain f32 reference.
    assert jnp.allclose(y, x @ weight.T + bias, atol=5e-2, rtol=5e-2)

    # No-bias variant (separate compiled kernel, no zero-bias materialized).
    y_nb = linear_wrapper_forward(x, weight, None)
    jax.block_until_ready(y_nb)
    ref_nb = jnp.einsum("...k,nk->...n", x.astype(jnp.bfloat16),
                        weight.astype(jnp.bfloat16),
                        preferred_element_type=jnp.float32)
    assert jnp.allclose(y_nb, ref_nb, atol=1e-2, rtol=1e-2)

    # Larger, non-tile-aligned shapes: exercises tiling over all three grid
    # axes, shape-adaptive tiles, padding/slicing and the megacore guard.
    kx2, kw2, kb2 = jax.random.split(jax.random.PRNGKey(1), 3)
    x2 = jax.random.normal(kx2, (3, 300, 777), dtype=jnp.float32)
    w2 = jax.random.normal(kw2, (1100, 777), dtype=jnp.float32) * 0.05
    b2 = jax.random.normal(kb2, (1100,), dtype=jnp.float32) * 0.05
    y2 = linear_wrapper_forward(x2, w2, b2)
    jax.block_until_ready(y2)
    ref2 = (jnp.einsum("...k,nk->...n", x2.astype(jnp.bfloat16),
                       w2.astype(jnp.bfloat16),
                       preferred_element_type=jnp.float32) + b2)
    assert y2.shape == (3, 300, 1100)
    assert jnp.allclose(y2, ref2, atol=1e-2, rtol=1e-2)

    print("KERNEL_OK")
</pallas_src>

<mosaic_0001>
module attributes {stable_mosaic.version = 11 : i64} {
  func.func @_linear_kernel_bias(%arg0: i32, %arg1: i32, %arg2: i32, %arg3: memref<16x128xbf16, #tpu.memory_space<vmem>>, %arg4: memref<128x128xbf16, #tpu.memory_space<vmem>>, %arg5: memref<1x128xf32, #tpu.memory_space<vmem>>, %arg6: memref<16x128xf32, #tpu.memory_space<vmem>>, %arg7: memref<16x128xf32, #tpu.memory_space<vmem>>) attributes {dimension_semantics = [#tpu.dimension_semantics<parallel>, #tpu.dimension_semantics<parallel>, #tpu.dimension_semantics<arbitrary>], iteration_bounds = array<i64: 1, 1, 1>, scalar_prefetch = 0 : i64, scratch_operands = 1 : i64, tpu.core_type = #tpu.core_type<tc>, window_params = [{transform_indices = @transform_0, window_bounds = array<i64: 16, 128>}, {transform_indices = @transform_1, window_bounds = array<i64: 128, 128>}, {transform_indices = @transform_2, window_bounds = array<i64: 1, 128>}, {transform_indices = @transform_3, window_bounds = array<i64: 16, 128>}]} {
    %c0_i32 = arith.constant 0 : i32
    %0 = arith.cmpi eq, %arg2, %c0_i32 : i32
    %1 = arith.extui %0 : i1 to i32
    %c0_i32_0 = arith.constant 0 : i32
    %2 = arith.cmpi ne, %1, %c0_i32_0 : i32
    scf.if %2 {
      %cst_10 = arith.constant 0.000000e+00 : f32
      %12 = vector.broadcast %cst_10 : f32 to vector<16x128xf32>
      %c0_11 = arith.constant 0 : index
      %c0_12 = arith.constant 0 : index
      %13 = vector.load %arg7[%c0_11, %c0_12] : memref<16x128xf32, #tpu.memory_space<vmem>>, vector<16x128xf32>
      tpu.vector_store %arg7[%c0_11, %c0_12], %12 {strides = array<i32>} : memref<16x128xf32, #tpu.memory_space<vmem>>, vector<16x128xf32>,
    } else {
    }
    %c0 = arith.constant 0 : index
    %c0_1 = arith.constant 0 : index
    %3 = vector.load %arg7[%c0, %c0_1] : memref<16x128xf32, #tpu.memory_space<vmem>>, vector<16x128xf32>
    %c0_2 = arith.constant 0 : index
    %c0_3 = arith.constant 0 : index
    %4 = vector.load %arg3[%c0_2, %c0_3] : memref<16x128xbf16, #tpu.memory_space<vmem>>, vector<16x128xbf16>
    %c0_4 = arith.constant 0 : index
    %c0_5 = arith.constant 0 : index
    %5 = vector.load %arg4[%c0_4, %c0_5] : memref<128x128xbf16, #tpu.memory_space<vmem>>, vector<128x128xbf16>
    %cst = arith.constant dense<0.000000e+00> : vector<16x128xf32>
    %6 = tpu.matmul %4, %5, %cst {dimension_numbers = #tpu.dot_dimension_numbers<[1], [0], [0], [1], [0, 0, 1, 1], [], []>} : vector<16x128xbf16>, vector<128x128xbf16>, vector<16x128xf32> -> vector<16x128xf32>
    %7 = arith.addf %3, %6 : vector<16x128xf32>
    %c0_6 = arith.constant 0 : index
    %c0_7 = arith.constant 0 : index
    %8 = vector.load %arg7[%c0_6, %c0_7] : memref<16x128xf32, #tpu.memory_space<vmem>>, vector<16x128xf32>
    tpu.vector_store %arg7[%c0_6, %c0_7], %7 {strides = array<i32>} : memref<16x128xf32, #tpu.memory_space<vmem>>, vector<16x128xf32>,
    %c0_i32_8 = arith.constant 0 : i32
    %9 = arith.cmpi eq, %arg2, %c0_i32_8 : i32
    %10 = arith.extui %9 : i1 to i32
    %c0_i32_9 = arith.constant 0 : i32
    %11 = arith.cmpi ne, %10, %c0_i32_9 : i32
    scf.if %11 {
      %c0_10 = arith.constant 0 : index
      %c0_11 = arith.constant 0 : index
      %12 = vector.load %arg7[%c0_10, %c0_11] : memref<16x128xf32, #tpu.memory_space<vmem>>, vector<16x128xf32>
      %c0_12 = arith.constant 0 : index
      %c0_13 = arith.constant 0 : index
      %13 = vector.load %arg5[%c0_12, %c0_13] : memref<1x128xf32, #tpu.memory_space<vmem>>, vector<1x128xf32>
      %14 = vector.broadcast %13 : vector<1x128xf32> to vector<16x128xf32>
      %15 = arith.addf %12, %14 : vector<16x128xf32>
      %c0_14 = arith.constant 0 : index
      %c0_15 = arith.constant 0 : index
      %16 = vector.load %arg6[%c0_14, %c0_15] : memref<16x128xf32, #tpu.memory_space<vmem>>, vector<16x128xf32>
      tpu.vector_store %arg6[%c0_14, %c0_15], %15 {strides = array<i32>} : memref<16x128xf32, #tpu.memory_space<vmem>>, vector<16x128xf32>,
    } else {
    }
    return
  }
  func.func @transform_0(%arg0: i32, %arg1: i32, %arg2: i32) -> (i32, i32) {
    %c0_i32 = arith.constant 0 : i32
    return %arg0, %arg2 : i32, i32
  }
  func.func @transform_1(%arg0: i32, %arg1: i32, %arg2: i32) -> (i32, i32) {
    %c0_i32 = arith.constant 0 : i32
    return %arg2, %arg1 : i32, i32
  }
  func.func @transform_2(%arg0: i32, %arg1: i32, %arg2: i32) -> (i32, i32) {
    %c0_i32 = arith.constant 0 : i32
    %c0_i32_0 = arith.constant 0 : i32
    return %c0_i32, %arg1 : i32, i32
  }
  func.func @transform_3(%arg0: i32, %arg1: i32, %arg2: i32) -> (i32, i32) {
    %c0_i32 = arith.constant 0 : i32
    return %arg0, %arg1 : i32, i32
  }
}

</mosaic_0001>

<llo_original>
// kernel: _linear_pallas.1
$region0: #{_linear_pallas.1}
  #allocation0 [shape = 'u32[]', space=smem, size = 0x4, offset = 0x4, fixed_abs, tag = 'smem constant byte address 0x4 - core index']
  #allocation1 [shape = 'u32[144,128]{1,0:T(1,128)}', space=vmem, size = 0x12000, scoped, tag = 'internal scratch']
  #allocation2 [shape = 'f32[16,128]{1,0:T(8,128)}', space=vmem, size = 0x2000, scoped, tag = 'scratch operand']
  %s0 = inlined_call_operand.hbm [shape: bf16[16,128], index: 0, kind: input, shape index: {}]
  %s1 = inlined_call_operand.hbm [shape: bf16[128,128], index: 1, kind: input, shape index: {}]
  %s2 = inlined_call_operand.hbm [shape: f32[1,128], index: 2, kind: input, shape index: {}]
  %s3 = inlined_call_operand.hbm [shape: f32[16,128], index: 3, kind: output, shape index: {}]
  %s4 = sld [smem:[#allocation0]]
  $region42: #{_linear_pallas.1} parent=0
    _
  %s6 = ssub.s32 1, %s4
  %s7 = scalar_select 0, %s6, %s4
  $region1: #{_linear_pallas.1} parent=0
    #allocation3 [shape = 'u8[4096]{0}', space=vmem, size = 0x1000, scoped, tag = 'input window, operand 0, single buffered']
    #allocation4 [shape = 's32[1]{0}', space=sflag, size = 0x4, scoped, tag = 'scoped memory for _linear_pallas.1']
    #allocation5 [shape = 's32[1]{0}', space=sflag, size = 0x4, scoped, tag = 'scoped memory for _linear_pallas.1']
    #allocation6 [shape = 'u8[32768]{0}', space=vmem, size = 0x8000, scoped, tag = 'input window, operand 1, single buffered']
    #allocation7 [shape = 's32[1]{0}', space=sflag, size = 0x4, scoped, tag = 'scoped memory for _linear_pallas.1']
    #allocation8 [shape = 'u8[512]{0}', space=vmem, size = 0x400, scoped, tag = 'input window, operand 2, single buffered']
    #allocation9 [shape = 'u8[8192]{0}', space=vmem, size = 0x2000, scoped, tag = 'output window, operand 0, single buffered']
    %8 = vsyncpa [#allocation4], 0
    %9 = vsyncpa [#allocation7], 0
    %10 = vsyncpa [#allocation5], 0
    // Predicated region
    $region2: #{_linear_pallas.1} parent=1 // pred_check
      _
    $region3: #{_linear_pallas.1} parent=1 // pred_check_branch
      %12 = sbr.rel (0) target = $region5
    $region4: #{_linear_pallas.1} parent=1 // pred_region
      %s14 = ssub.s32 128, 128
      %15 = vsyncadd [#allocation4], %s14
      %s16 = sshll.u32 [#allocation3], 4
      %s17 = int_to_ptr.vmem [resolvable:$true] %s16
      %22 = dma.hbm_to_vmem [thread:$0]  %s0, 128, %s17, [#allocation4], 64, 64, 4
    $region5: #{_linear_pallas.1} parent=1 // pred_fallthru
      _
    // Predicated region
    $region6: #{_linear_pallas.1} parent=1 // pred_check
      _
    $region7: #{_linear_pallas.1} parent=1 // pred_check_branch
      %24 = sbr.rel (0) target = $region9
    $region8: #{_linear_pallas.1} parent=1 // pred_region
      %s26 = ssub.s32 1024, 1024
      %27 = vsyncadd [#allocation7], %s26
      %s28 = sshll.u32 [#allocation6], 4
      %s29 = int_to_ptr.vmem [resolvable:$true] %s28
      %34 = dma.hbm_to_vmem [thread:$0]  %s1, 1024, %s29, [#allocation7], 64, 64, 4
    $region9: #{_linear_pallas.1} parent=1 // pred_fallthru
      _
    // Predicated region
    $region10: #{_linear_pallas.1} parent=1 // pred_check
      _
    $region11: #{_linear_pallas.1} parent=1 // pred_check_branch
      %36 = sbr.rel (0) target = $region13
    $region12: #{_linear_pallas.1} parent=1 // pred_region
      %s38 = ssub.s32 16, 16
      %39 = vsyncadd [#allocation7], %s38
      %s41 = sshll.u32 [#allocation8], 4
      %s42 = int_to_ptr.vmem [resolvable:$true] %s41
      %44 = dma.hbm_to_vmem [thread:$0]  %s2, 16, %s42, [#allocation7]
    $region13: #{_linear_pallas.1} parent=1 // pred_fallthru
      _
    // Predicated region
    $region14: #{_linear_pallas.1} parent=1 // pred_check
      _
    $region15: #{_linear_pallas.1} parent=1 // pred_check_branch
      %46 = sbr.rel (0) target = $region17
    $region16: #{_linear_pallas.1} parent=1 // pred_region
      %47 = dma.done [#allocation4], 128
    $region17: #{_linear_pallas.1} parent=1 // pred_fallthru
      _
    // Predicated region
    $region18: #{_linear_pallas.1} parent=1 // pred_check
      _
    $region19: #{_linear_pallas.1} parent=1 // pred_check_branch
      %49 = sbr.rel (0) target = $region21
    $region20: #{_linear_pallas.1} parent=1 // pred_region
      %50 = dma.done [#allocation7], 1024
    $region21: #{_linear_pallas.1} parent=1 // pred_fallthru
      _
    // Predicated region
    $region22: #{_linear_pallas.1} parent=1 // pred_check
      _
    $region23: #{_linear_pallas.1} parent=1 // pred_check_branch
      %52 = sbr.rel (0) target = $region25
    $region24: #{_linear_pallas.1} parent=1 // pred_region
      %53 = dma.done [#allocation7], 16
    $region25: #{_linear_pallas.1} parent=1 // pred_fallthru
      _
    %p55 = scmp.eq.s32.totalorder 0, 0
    // Predicated region
    $region26: #{_linear_pallas.1} parent=1 // pred_check
      %p56 = pneg %p55
    $region27: #{_linear_pallas.1} parent=1 // pred_check_branch
      %58 = sbr.rel (%p56) target = $region29
    $region28: #{_linear_pallas.1} parent=1 // pred_region
      %59 = vst [vmem:[#allocation2] sm:$0xff] 0.0
      %60 = vst [vmem:[#allocation2 + $0x8] sm:$0xff] 0.0
    $region29: #{_linear_pallas.1} parent=1 // pred_fallthru
      _
    %v61 = vld [vmem:[#allocation2] sm:$0xff]
    %v62 = vld [vmem:[#allocation2 + $0x8] sm:$0xff]
    %v63 = vld [vmem:[#allocation3] sm:$0xf]
    %v64 = vld [vmem:[#allocation3 + $0x4] sm:$0xf]
    %v65 = vld [vmem:[#allocation6] sm:$0xf]
    %v66 = vld [vmem:[#allocation6 + $0x4] sm:$0xf]
    %v67 = vld [vmem:[#allocation6 + $0x8] sm:$0xf]
    %v68 = vld [vmem:[#allocation6 + $0xc] sm:$0xf]
    %v69 = vld [vmem:[#allocation6 + $0x10] sm:$0xf]
    %v70 = vld [vmem:[#allocation6 + $0x14] sm:$0xf]
    %v71 = vld [vmem:[#allocation6 + $0x18] sm:$0xf]
    %v72 = vld [vmem:[#allocation6 + $0x1c] sm:$0xf]
    %v73 = vld [vmem:[#allocation6 + $0x20] sm:$0xf]
    %v74 = vld [vmem:[#allocation6 + $0x24] sm:$0xf]
    %v75 = vld [vmem:[#allocation6 + $0x28] sm:$0xf]
    %v76 = vld [vmem:[#allocation6 + $0x2c] sm:$0xf]
    %v77 = vld [vmem:[#allocation6 + $0x30] sm:$0xf]
    %v78 = vld [vmem:[#allocation6 + $0x34] sm:$0xf]
    %v79 = vld [vmem:[#allocation6 + $0x38] sm:$0xf]
    %v80 = vld [vmem:[#allocation6 + $0x3c] sm:$0xf]
    %v83 = vunpack.c.l.b16 %v63
    %v84 = vunpack.c.l.b16 %v64
    %v85 = vpack.c.b16 %v84, %v83
    %v103 = vunpack.c.l.b16 %v65
    %v104 = vunpack.c.l.b16 %v66
    %v105 = vunpack.c.l.b16 %v67
    %v106 = vunpack.c.l.b16 %v68
    %v107 = vunpack.c.l.b16 %v69
    %v108 = vunpack.c.l.b16 %v70
    %v109 = vunpack.c.l.b16 %v71
    %v110 = vunpack.c.l.b16 %v72
    %v111 = vunpack.c.l.b16 %v73
    %v112 = vunpack.c.l.b16 %v74
    %v113 = vunpack.c.l.b16 %v75
    %v114 = vunpack.c.l.b16 %v76
    %v115 = vunpack.c.l.b16 %v77
    %v116 = vunpack.c.l.b16 %v78
    %v117 = vunpack.c.l.b16 %v79
    %v118 = vunpack.c.l.b16 %v80
    %v119 = vpack.c.b16 %v104, %v103
    %v120 = vpack.c.b16 %v106, %v105
    %v121 = vpack.c.b16 %v108, %v107
    %v122 = vpack.c.b16 %v110, %v109
    %v123 = vpack.c.b16 %v112, %v111
    %v124 = vpack.c.b16 %v114, %v113
    %v125 = vpack.c.b16 %v116, %v115
    %v126 = vpack.c.b16 %v118, %v117
    %135 = vmatprep.subr.bf16.mxu0 0
    %136 = vmatpush1.bf16.msra.mxu0 %v119
    %137 = vmatprep.subr.bf16.mxu0 0
    %138 = vmatpush1.bf16.msra.mxu0 %v120
    %139 = vmatprep.subr.bf16.mxu0 0
    %140 = vmatpush1.bf16.msra.mxu0 %v121
    %141 = vmatprep.subr.bf16.mxu0 0
    %142 = vmatpush1.bf16.msra.mxu0 %v122
    %143 = vmatprep.subr.bf16.mxu0 0
    %144 = vmatpush1.bf16.msra.mxu0 %v123
    %145 = vmatprep.subr.bf16.mxu0 0
    %146 = vmatpush1.bf16.msra.mxu0 %v124
    %147 = vmatprep.subr.bf16.mxu0 0
    %148 = vmatpush1.bf16.msra.mxu0 %v125
    %149 = vmatprep.subr.bf16.mxu0 0
    %150 = vmatpush1.bf16.msra.mxu0 %v126
    %151 = vmatprep.subr.bf16.mxu0 0
    %152 = vmatpush1.bf16.msra.mxu0 0
    %153 = vmatprep.subr.bf16.mxu0 0
    %154 = vmatpush1.bf16.msra.mxu0 0
    %155 = vmatprep.subr.bf16.mxu0 0
    %156 = vmatpush1.bf16.msra.mxu0 0
    %157 = vmatprep.subr.bf16.mxu0 0
    %158 = vmatpush1.bf16.msra.mxu0 0
    %159 = vmatprep.subr.bf16.mxu0 0
    %160 = vmatpush1.bf16.msra.mxu0 0
    %161 = vmatprep.subr.bf16.mxu0 0
    %162 = vmatpush1.bf16.msra.mxu0 0
    %163 = vmatprep.subr.bf16.mxu0 0
    %164 = vmatpush1.bf16.msra.mxu0 0
    %165 = vmatprep.subr.bf16.mxu0 0
    %166 = vmatpush1.bf16.msra.mxu0 0
    %167 = vmatprep.mubr.bf16.mxu0 0
    %168 = vmatmul.mubr.bf16.gmra.mrb[0].mxu0 %v85
    %v169 = vpop.f32.mrb[0].mxu0
    %v170 = vadd.f32 0.0, %v169
    %v171 = vpop.f32.mrb[0].mxu0
    %v172 = vpop.f32.mrb[0].mxu0
    %v173 = vadd.f32 0.0, %v172
    %v174 = vpop.f32.mrb[0].mxu0
    %175 = vdwg.mxu0
    %v176 = vadd.f32 %v61, %v170
    %v177 = vadd.f32 %v62, %v173
    %178 = vst [vmem:[#allocation2] sm:$0xff] %v176
    %179 = vst [vmem:[#allocation2 + $0x8] sm:$0xff] %v177
    // Predicated region
    $region30: #{_linear_pallas.1} parent=1 // pred_check
      %p180 = pneg %p55
    $region31: #{_linear_pallas.1} parent=1 // pred_check_branch
      %182 = sbr.rel (%p180) target = $region33
    $region32: #{_linear_pallas.1} parent=1 // pred_region
      %v183 = vld [vmem:[#allocation2] sm:$0xff]
      %v184 = vld [vmem:[#allocation2 + $0x8] sm:$0xff]
      %v185 = vld [vmem:[#allocation8] sm:$0x1]
      %v187 = vlaneseq
      %v188 = vshrl.u32 %v187, 7
      %v189 = vsub.s32 0, %v188
      %v190 = vrot.slane %v185, %v189
      %v192 = vadd.f32 %v183, %v190
      %v193 = vadd.f32 %v184, %v190
      %194 = vst [vmem:[#allocation9] sm:$0xff] %v192
      %195 = vst [vmem:[#allocation9 + $0x8] sm:$0xff] %v193
    $region33: #{_linear_pallas.1} parent=1 // pred_fallthru
      _
    // Predicated region
    $region34: #{_linear_pallas.1} parent=1 // pred_check
      _
    $region35: #{_linear_pallas.1} parent=1 // pred_check_branch
      %197 = sbr.rel (0) target = $region37
    $region36: #{_linear_pallas.1} parent=1 // pred_region
      %s199 = ssub.s32 256, 256
      %200 = vsyncadd [#allocation5], %s199
      %s201 = sshll.u32 [#allocation9], 4
      %s202 = int_to_ptr.vmem [resolvable:$true] %s201
      %207 = dma.vmem_to_hbm [thread:$0]  %s202, 256, %s3, [#allocation5], 128, 128, 8
    $region37: #{_linear_pallas.1} parent=1 // pred_fallthru
      _
    // Predicated region
    $region38: #{_linear_pallas.1} parent=1 // pred_check
      _
    $region39: #{_linear_pallas.1} parent=1 // pred_check_branch
      %209 = sbr.rel (0) target = $region41
    $region40: #{_linear_pallas.1} parent=1 // pred_region
      %210 = dma.done [#allocation5], 256
    $region41: #{_linear_pallas.1} parent=1 // pred_fallthru
      _
    %211 = vsyncpa [#allocation4], 1
    %212 = vsyncpa [#allocation7], 1
    %213 = vsyncpa [#allocation5], 1

</llo_original>
